<compile_context>
chip_gen: v5e
topology: v5e:2x2
jax: 0.10.0
libtpu: 0.0.40
codegen_flags: <defaults>
</compile_context>

<pallas_src>
import jax
import jax.numpy as jnp
from jax.experimental import pallas as pl
from jax.experimental.pallas import tpu as pltpu  # noqa: F401  (TPU backend)

LANE = 128  # lane-native width all layers are padded to


def mlp_kernel(x_ref, w1_ref, b1_ref, ws_ref, bs_ref, o_ref):
    # Layer 1: (B, 384) @ (384, 128) -> (B, 128), bias + ReLU in f32.
    h = jnp.dot(x_ref[...].astype(jnp.bfloat16), w1_ref[...],
                preferred_element_type=jnp.float32)
    h = jnp.maximum(h + b1_ref[...], 0.0)

    # Layers 2..6 stacked: ws_ref (5, 128, 128) bf16, bs_ref (5, 1, 128) f32.
    # Static unroll (5 iterations); ReLU on all but the last layer.
    n = ws_ref.shape[0]
    for i in range(n):
        y = jnp.dot(h.astype(jnp.bfloat16), ws_ref[i],
                    preferred_element_type=jnp.float32)
        y = y + bs_ref[i]
        h = jnp.maximum(y, 0.0) if i < n - 1 else y

    o_ref[...] = h.astype(o_ref.dtype)


def _pad_and_pack(params):
    """Zero-pad params to lane-native shapes and pack for the kernel.

    Returns (w1, b1, w_stack, b_stack):
      w1:      (384, 128)    bf16
      b1:      (1, 128)      f32
      w_stack: (5, 128, 128) bf16   (hidden2..hidden6, zero-padded)
      b_stack: (5, 1, 128)   f32
    """
    (w1, b1), rest = params[0], params[1:]

    def pad_w(w, rows, cols):
        out = jnp.zeros((rows, cols), jnp.float32)
        return out.at[:w.shape[0], :w.shape[1]].set(w)

    def pad_b(b, cols):
        out = jnp.zeros((1, cols), jnp.float32)
        return out.at[0, :b.shape[0]].set(b)

    w1_p = pad_w(w1, w1.shape[0], LANE).astype(jnp.bfloat16)
    b1_p = pad_b(b1, LANE)
    w_stack = jnp.stack([pad_w(w, LANE, LANE) for w, _ in rest]
                        ).astype(jnp.bfloat16)
    b_stack = jnp.stack([pad_b(b, LANE) for _, b in rest])
    return w1_p, b1_p, w_stack, b_stack


def mlp_forward(x, params):
    """x: (B, n_features) f32. params: list of (w:(in,out) f32, b:(out,) f32)."""
    B = x.shape[0]
    out_dim = params[-1][0].shape[1]
    w1, b1, ws, bs = _pad_and_pack(params)

    # Small problem, one grid point: every operand is a full-array block
    # resident in VMEM (full-array blocks are exempt from the (8,128) rule).
    full = lambda a: pl.BlockSpec(a.shape, lambda: (0,) * a.ndim)

    out_padded = pl.pallas_call(
        mlp_kernel,
        out_shape=jax.ShapeDtypeStruct((B, LANE), jnp.float32),
        grid=(),
        in_specs=[full(x), full(w1), full(b1), full(ws), full(bs)],
        out_specs=pl.BlockSpec((B, LANE), lambda: (0, 0)),
    )(x, w1, b1, ws, bs)

    # Padded lanes are exactly zero; slice back to the true output width.
    return out_padded[:, :out_dim]


def init_params(key, n_features):
    """Deterministic init mimicking PyTorch Linear's U(-1/sqrt(fan_in), ..)."""
    dims = [n_features, 100, 100, 100, 100, 100, 6]
    params = []
    for i in range(len(dims) - 1):
        fan_in, fan_out = dims[i], dims[i + 1]
        key, kw, kb = jax.random.split(key, 3)
        bound = 1.0 / jnp.sqrt(fan_in)
        w = jax.random.uniform(kw, (fan_in, fan_out), jnp.float32, -bound, bound)
        b = jax.random.uniform(kb, (fan_out,), jnp.float32, -bound, bound)
        params.append((w, b))
    return params


def mlp_reference_f32(x, params):
    """Full-precision reference (matches the PyTorch forward)."""
    h = x
    for i, (w, b) in enumerate(params):
        h = h @ w + b
        if i < len(params) - 1:
            h = jnp.maximum(h, 0.0)
    return h


def mlp_reference_bf16(x, params):
    """Reference mirroring the kernel's bf16-operand / f32-accumulate math."""
    h = x
    for i, (w, b) in enumerate(params):
        h = jnp.dot(h.astype(jnp.bfloat16), w.astype(jnp.bfloat16),
                    preferred_element_type=jnp.float32) + b
        if i < len(params) - 1:
            h = jnp.maximum(h, 0.0)
    return h


if __name__ == "__main__":
    n_features = 384
    batch = 8

    key = jax.random.PRNGKey(0)
    key, kx = jax.random.split(key)
    x = jax.random.normal(kx, (batch, n_features), dtype=jnp.float32)
    params = init_params(key, n_features)

    out = mlp_forward(x, params)
    out = jax.block_until_ready(out)
    assert out.shape == (batch, 6), out.shape

    # Tight check vs. a reference using the same bf16/f32 arithmetic.
    ref_bf16 = mlp_reference_bf16(x, params)
    assert jnp.allclose(out, ref_bf16, atol=1e-3, rtol=1e-3), (
        float(jnp.max(jnp.abs(out - ref_bf16))))

    # Loose check vs. the full-f32 PyTorch-equivalent forward (bf16 weights).
    ref_f32 = mlp_reference_f32(x, params)
    assert jnp.allclose(out, ref_f32, atol=5e-2, rtol=5e-2), (
        float(jnp.max(jnp.abs(out - ref_f32))))

    print("KERNEL_OK")
</pallas_src>

<mosaic_0001>
module attributes {stable_mosaic.version = 11 : i64} {
  func.func @mlp_kernel(%arg0: memref<8x384xf32, #tpu.memory_space<vmem>>, %arg1: memref<384x128xbf16, #tpu.memory_space<vmem>>, %arg2: memref<1x128xf32, #tpu.memory_space<vmem>>, %arg3: memref<5x128x128xbf16, #tpu.memory_space<vmem>>, %arg4: memref<5x1x128xf32, #tpu.memory_space<vmem>>, %arg5: memref<8x128xf32, #tpu.memory_space<vmem>>) attributes {dimension_semantics = [], scalar_prefetch = 0 : i64, scratch_operands = 0 : i64, tpu.core_type = #tpu.core_type<tc>} {
    %c0 = arith.constant 0 : index
    %c0_0 = arith.constant 0 : index
    %0 = vector.load %arg0[%c0, %c0_0] : memref<8x384xf32, #tpu.memory_space<vmem>>, vector<8x384xf32>
    %1 = arith.truncf %0 : vector<8x384xf32> to vector<8x384xbf16>
    %c0_1 = arith.constant 0 : index
    %c0_2 = arith.constant 0 : index
    %2 = vector.load %arg1[%c0_1, %c0_2] : memref<384x128xbf16, #tpu.memory_space<vmem>>, vector<384x128xbf16>
    %cst = arith.constant dense<0.000000e+00> : vector<8x128xf32>
    %3 = tpu.matmul %1, %2, %cst {dimension_numbers = #tpu.dot_dimension_numbers<[1], [0], [0], [1], [0, 0, 1, 1], [], []>} : vector<8x384xbf16>, vector<384x128xbf16>, vector<8x128xf32> -> vector<8x128xf32>
    %c0_3 = arith.constant 0 : index
    %c0_4 = arith.constant 0 : index
    %4 = vector.load %arg2[%c0_3, %c0_4] : memref<1x128xf32, #tpu.memory_space<vmem>>, vector<1x128xf32>
    %5 = vector.broadcast %4 : vector<1x128xf32> to vector<8x128xf32>
    %6 = arith.addf %3, %5 : vector<8x128xf32>
    %cst_5 = arith.constant 0.000000e+00 : f32
    %7 = vector.broadcast %cst_5 : f32 to vector<8x128xf32>
    %8 = arith.maximumf %6, %7 : vector<8x128xf32>
    %9 = arith.truncf %8 : vector<8x128xf32> to vector<8x128xbf16>
    %c0_6 = arith.constant 0 : index
    %c0_7 = arith.constant 0 : index
    %c0_8 = arith.constant 0 : index
    %10 = vector.load %arg3[%c0_6, %c0_7, %c0_8] : memref<5x128x128xbf16, #tpu.memory_space<vmem>>, vector<1x128x128xbf16>
    %11 = vector.shape_cast %10 : vector<1x128x128xbf16> to vector<128x128xbf16>
    %cst_9 = arith.constant dense<0.000000e+00> : vector<8x128xf32>
    %12 = tpu.matmul %9, %11, %cst_9 {dimension_numbers = #tpu.dot_dimension_numbers<[1], [0], [0], [1], [0, 0, 1, 1], [], []>} : vector<8x128xbf16>, vector<128x128xbf16>, vector<8x128xf32> -> vector<8x128xf32>
    %c0_10 = arith.constant 0 : index
    %c0_11 = arith.constant 0 : index
    %c0_12 = arith.constant 0 : index
    %13 = vector.load %arg4[%c0_10, %c0_11, %c0_12] : memref<5x1x128xf32, #tpu.memory_space<vmem>>, vector<1x1x128xf32>
    %14 = vector.shape_cast %13 : vector<1x1x128xf32> to vector<1x128xf32>
    %15 = vector.broadcast %14 : vector<1x128xf32> to vector<8x128xf32>
    %16 = arith.addf %12, %15 : vector<8x128xf32>
    %cst_13 = arith.constant 0.000000e+00 : f32
    %17 = vector.broadcast %cst_13 : f32 to vector<8x128xf32>
    %18 = arith.maximumf %16, %17 : vector<8x128xf32>
    %19 = arith.truncf %18 : vector<8x128xf32> to vector<8x128xbf16>
    %c1 = arith.constant 1 : index
    %c0_14 = arith.constant 0 : index
    %c0_15 = arith.constant 0 : index
    %20 = vector.load %arg3[%c1, %c0_14, %c0_15] : memref<5x128x128xbf16, #tpu.memory_space<vmem>>, vector<1x128x128xbf16>
    %21 = vector.shape_cast %20 : vector<1x128x128xbf16> to vector<128x128xbf16>
    %cst_16 = arith.constant dense<0.000000e+00> : vector<8x128xf32>
    %22 = tpu.matmul %19, %21, %cst_16 {dimension_numbers = #tpu.dot_dimension_numbers<[1], [0], [0], [1], [0, 0, 1, 1], [], []>} : vector<8x128xbf16>, vector<128x128xbf16>, vector<8x128xf32> -> vector<8x128xf32>
    %c1_17 = arith.constant 1 : index
    %c0_18 = arith.constant 0 : index
    %c0_19 = arith.constant 0 : index
    %23 = vector.load %arg4[%c1_17, %c0_18, %c0_19] : memref<5x1x128xf32, #tpu.memory_space<vmem>>, vector<1x1x128xf32>
    %24 = vector.shape_cast %23 : vector<1x1x128xf32> to vector<1x128xf32>
    %25 = vector.broadcast %24 : vector<1x128xf32> to vector<8x128xf32>
    %26 = arith.addf %22, %25 : vector<8x128xf32>
    %cst_20 = arith.constant 0.000000e+00 : f32
    %27 = vector.broadcast %cst_20 : f32 to vector<8x128xf32>
    %28 = arith.maximumf %26, %27 : vector<8x128xf32>
    %29 = arith.truncf %28 : vector<8x128xf32> to vector<8x128xbf16>
    %c2 = arith.constant 2 : index
    %c0_21 = arith.constant 0 : index
    %c0_22 = arith.constant 0 : index
    %30 = vector.load %arg3[%c2, %c0_21, %c0_22] : memref<5x128x128xbf16, #tpu.memory_space<vmem>>, vector<1x128x128xbf16>
    %31 = vector.shape_cast %30 : vector<1x128x128xbf16> to vector<128x128xbf16>
    %cst_23 = arith.constant dense<0.000000e+00> : vector<8x128xf32>
    %32 = tpu.matmul %29, %31, %cst_23 {dimension_numbers = #tpu.dot_dimension_numbers<[1], [0], [0], [1], [0, 0, 1, 1], [], []>} : vector<8x128xbf16>, vector<128x128xbf16>, vector<8x128xf32> -> vector<8x128xf32>
    %c2_24 = arith.constant 2 : index
    %c0_25 = arith.constant 0 : index
    %c0_26 = arith.constant 0 : index
    %33 = vector.load %arg4[%c2_24, %c0_25, %c0_26] : memref<5x1x128xf32, #tpu.memory_space<vmem>>, vector<1x1x128xf32>
    %34 = vector.shape_cast %33 : vector<1x1x128xf32> to vector<1x128xf32>
    %35 = vector.broadcast %34 : vector<1x128xf32> to vector<8x128xf32>
    %36 = arith.addf %32, %35 : vector<8x128xf32>
    %cst_27 = arith.constant 0.000000e+00 : f32
    %37 = vector.broadcast %cst_27 : f32 to vector<8x128xf32>
    %38 = arith.maximumf %36, %37 : vector<8x128xf32>
    %39 = arith.truncf %38 : vector<8x128xf32> to vector<8x128xbf16>
    %c3 = arith.constant 3 : index
    %c0_28 = arith.constant 0 : index
    %c0_29 = arith.constant 0 : index
    %40 = vector.load %arg3[%c3, %c0_28, %c0_29] : memref<5x128x128xbf16, #tpu.memory_space<vmem>>, vector<1x128x128xbf16>
    %41 = vector.shape_cast %40 : vector<1x128x128xbf16> to vector<128x128xbf16>
    %cst_30 = arith.constant dense<0.000000e+00> : vector<8x128xf32>
    %42 = tpu.matmul %39, %41, %cst_30 {dimension_numbers = #tpu.dot_dimension_numbers<[1], [0], [0], [1], [0, 0, 1, 1], [], []>} : vector<8x128xbf16>, vector<128x128xbf16>, vector<8x128xf32> -> vector<8x128xf32>
    %c3_31 = arith.constant 3 : index
    %c0_32 = arith.constant 0 : index
    %c0_33 = arith.constant 0 : index
    %43 = vector.load %arg4[%c3_31, %c0_32, %c0_33] : memref<5x1x128xf32, #tpu.memory_space<vmem>>, vector<1x1x128xf32>
    %44 = vector.shape_cast %43 : vector<1x1x128xf32> to vector<1x128xf32>
    %45 = vector.broadcast %44 : vector<1x128xf32> to vector<8x128xf32>
    %46 = arith.addf %42, %45 : vector<8x128xf32>
    %cst_34 = arith.constant 0.000000e+00 : f32
    %47 = vector.broadcast %cst_34 : f32 to vector<8x128xf32>
    %48 = arith.maximumf %46, %47 : vector<8x128xf32>
    %49 = arith.truncf %48 : vector<8x128xf32> to vector<8x128xbf16>
    %c4 = arith.constant 4 : index
    %c0_35 = arith.constant 0 : index
    %c0_36 = arith.constant 0 : index
    %50 = vector.load %arg3[%c4, %c0_35, %c0_36] : memref<5x128x128xbf16, #tpu.memory_space<vmem>>, vector<1x128x128xbf16>
    %51 = vector.shape_cast %50 : vector<1x128x128xbf16> to vector<128x128xbf16>
    %cst_37 = arith.constant dense<0.000000e+00> : vector<8x128xf32>
    %52 = tpu.matmul %49, %51, %cst_37 {dimension_numbers = #tpu.dot_dimension_numbers<[1], [0], [0], [1], [0, 0, 1, 1], [], []>} : vector<8x128xbf16>, vector<128x128xbf16>, vector<8x128xf32> -> vector<8x128xf32>
    %c4_38 = arith.constant 4 : index
    %c0_39 = arith.constant 0 : index
    %c0_40 = arith.constant 0 : index
    %53 = vector.load %arg4[%c4_38, %c0_39, %c0_40] : memref<5x1x128xf32, #tpu.memory_space<vmem>>, vector<1x1x128xf32>
    %54 = vector.shape_cast %53 : vector<1x1x128xf32> to vector<1x128xf32>
    %55 = vector.broadcast %54 : vector<1x128xf32> to vector<8x128xf32>
    %56 = arith.addf %52, %55 : vector<8x128xf32>
    %c0_41 = arith.constant 0 : index
    %c0_42 = arith.constant 0 : index
    %57 = vector.load %arg5[%c0_41, %c0_42] : memref<8x128xf32, #tpu.memory_space<vmem>>, vector<8x128xf32>
    tpu.vector_store %arg5[%c0_41, %c0_42], %56 {strides = array<i32>} : memref<8x128xf32, #tpu.memory_space<vmem>>, vector<8x128xf32>,
    return
  }
}

</mosaic_0001>

<llo_original>
// kernel: tpu_custom_call.1
$region0: #{tpu_custom_call.1}
  #allocation0 [shape = 'u32[]', space=smem, size = 0x4, offset = 0x4, fixed_abs, tag = 'smem constant byte address 0x4 - core index']
  #allocation1 [shape = 'u32[72,128]{1,0:T(1,128)}', space=vmem, size = 0x9000, scoped, tag = 'internal scratch']
  %s0 = inlined_call_operand.hbm [shape: f32[8,384], index: 0, kind: input, shape index: {}]
  %s1 = inlined_call_operand.hbm [shape: bf16[384,128], index: 1, kind: input, shape index: {}]
  %s2 = inlined_call_operand.vmem [shape: f32[1,128], index: 2, kind: input, shape index: {}]
  %s3 = inlined_call_operand.hbm [shape: bf16[5,128,128], index: 3, kind: input, shape index: {}]
  %s4 = inlined_call_operand.hbm [shape: f32[5,1,128], index: 4, kind: input, shape index: {}]
  %s5 = inlined_call_operand.hbm [shape: f32[8,128], index: 5, kind: output, shape index: {}]
  %s6 = sld [smem:[#allocation0]]
  $region46: #{tpu_custom_call.1} parent=0
    _
  %s8 = ssub.s32 1, %s6
  %s9 = scalar_select 0, %s8, %s6
  $region1: #{tpu_custom_call.1} parent=0
    #allocation2 [shape = 'u8[12288]{0}', space=vmem, size = 0x3000, scoped, tag = 'input window, operand 0, single buffered']
    #allocation3 [shape = 's32[1]{0}', space=sflag, size = 0x4, scoped, tag = 'scoped memory for tpu_custom_call.1']
    #allocation4 [shape = 's32[1]{0}', space=sflag, size = 0x4, scoped, tag = 'scoped memory for tpu_custom_call.1']
    #allocation5 [shape = 'u8[98304]{0}', space=vmem, size = 0x18000, scoped, tag = 'input window, operand 1, single buffered']
    #allocation6 [shape = 's32[1]{0}', space=sflag, size = 0x4, scoped, tag = 'scoped memory for tpu_custom_call.1']
    #allocation7 [shape = 'u8[163840]{0}', space=vmem, size = 0x28000, scoped, tag = 'input window, operand 3, single buffered']
    #allocation8 [shape = 'u8[2560]{0}', space=vmem, size = 0xc00, scoped, tag = 'input window, operand 4, single buffered']
    #allocation9 [shape = 's32[1]{0}', space=sflag, size = 0x4, scoped, tag = 'scoped memory for tpu_custom_call.1']
    #allocation10 [shape = 'u8[4096]{0}', space=vmem, size = 0x1000, scoped, tag = 'output window, operand 0, single buffered']
    %10 = vsyncpa [#allocation3], 0
    %11 = vsyncpa [#allocation6], 0
    %12 = vsyncpa [#allocation9], 0
    %13 = vsyncpa [#allocation4], 0
    // Predicated region
    $region2: #{tpu_custom_call.1} parent=1 // pred_check
      _
    $region3: #{tpu_custom_call.1} parent=1 // pred_check_branch
      %15 = sbr.rel (0) target = $region5
    $region4: #{tpu_custom_call.1} parent=1 // pred_region
      %17 = vsyncadd [#allocation3], 0
      %s19 = sshll.u32 %s0, 4
      %s20 = int_to_ptr.hbm [resolvable:$true] %s19
      %s21 = sshll.u32 [#allocation2], 4
      %s22 = int_to_ptr.vmem [resolvable:$true] %s21
      %24 = dma.hbm_to_vmem [thread:$0]  %s20, 384, %s22, [#allocation3]
    $region5: #{tpu_custom_call.1} parent=1 // pred_fallthru
      _
    // Predicated region
    $region6: #{tpu_custom_call.1} parent=1 // pred_check
      _
    $region7: #{tpu_custom_call.1} parent=1 // pred_check_branch
      %26 = sbr.rel (0) target = $region9
    $region8: #{tpu_custom_call.1} parent=1 // pred_region
      %28 = vsyncadd [#allocation6], 0
      %s29 = sshll.u32 %s1, 4
      %s30 = int_to_ptr.hbm [resolvable:$true] %s29
      %s31 = sshll.u32 [#allocation5], 4
      %s32 = int_to_ptr.vmem [resolvable:$true] %s31
      %37 = dma.hbm_to_vmem [thread:$0]  %s30, 3072, %s32, [#allocation6], 64, 64, 4
    $region9: #{tpu_custom_call.1} parent=1 // pred_fallthru
      _
    // Predicated region
    $region10: #{tpu_custom_call.1} parent=1 // pred_check
      _
    $region11: #{tpu_custom_call.1} parent=1 // pred_check_branch
      %39 = sbr.rel (0) target = $region13
    $region12: #{tpu_custom_call.1} parent=1 // pred_region
      _
    $region13: #{tpu_custom_call.1} parent=1 // pred_fallthru
      _
    // Predicated region
    $region14: #{tpu_custom_call.1} parent=1 // pred_check
      _
    $region15: #{tpu_custom_call.1} parent=1 // pred_check_branch
      %41 = sbr.rel (0) target = $region17
    $region16: #{tpu_custom_call.1} parent=1 // pred_region
      %43 = vsyncadd [#allocation6], 0
      %s44 = sshll.u32 %s3, 4
      %s45 = int_to_ptr.hbm [resolvable:$true] %s44
      %s46 = sshll.u32 [#allocation7], 4
      %s47 = int_to_ptr.vmem [resolvable:$true] %s46
      %52 = dma.hbm_to_vmem [thread:$0]  %s45, 5120, %s47, [#allocation6], 64, 64, 4
    $region17: #{tpu_custom_call.1} parent=1 // pred_fallthru
      _
    // Predicated region
    $region18: #{tpu_custom_call.1} parent=1 // pred_check
      _
    $region19: #{tpu_custom_call.1} parent=1 // pred_check_branch
      %54 = sbr.rel (0) target = $region21
    $region20: #{tpu_custom_call.1} parent=1 // pred_region
      %56 = vsyncadd [#allocation9], 0
      %s57 = sshll.u32 %s4, 4
      %s58 = int_to_ptr.hbm [resolvable:$true] %s57
      %s59 = sshll.u32 [#allocation8], 4
      %s60 = int_to_ptr.vmem [resolvable:$true] %s59
      %65 = dma.hbm_to_vmem [thread:$0]  %s58, 80, %s60, [#allocation9], 16, 16, 1
    $region21: #{tpu_custom_call.1} parent=1 // pred_fallthru
      _
    // Predicated region
    $region22: #{tpu_custom_call.1} parent=1 // pred_check
      _
    $region23: #{tpu_custom_call.1} parent=1 // pred_check_branch
      %67 = sbr.rel (0) target = $region25
    $region24: #{tpu_custom_call.1} parent=1 // pred_region
      %69 = dma.done [#allocation3], 384
    $region25: #{tpu_custom_call.1} parent=1 // pred_fallthru
      _
    // Predicated region
    $region26: #{tpu_custom_call.1} parent=1 // pred_check
      _
    $region27: #{tpu_custom_call.1} parent=1 // pred_check_branch
      %71 = sbr.rel (0) target = $region29
    $region28: #{tpu_custom_call.1} parent=1 // pred_region
      %73 = dma.done [#allocation6], 3072
    $region29: #{tpu_custom_call.1} parent=1 // pred_fallthru
      _
    // Predicated region
    $region30: #{tpu_custom_call.1} parent=1 // pred_check
      _
    $region31: #{tpu_custom_call.1} parent=1 // pred_check_branch
      %75 = sbr.rel (0) target = $region33
    $region32: #{tpu_custom_call.1} parent=1 // pred_region
      %77 = dma.done [#allocation6], 5120
    $region33: #{tpu_custom_call.1} parent=1 // pred_fallthru
      _
    // Predicated region
    $region34: #{tpu_custom_call.1} parent=1 // pred_check
      _
    $region35: #{tpu_custom_call.1} parent=1 // pred_check_branch
      %79 = sbr.rel (0) target = $region37
    $region36: #{tpu_custom_call.1} parent=1 // pred_region
      %81 = dma.done [#allocation9], 80
    $region37: #{tpu_custom_call.1} parent=1 // pred_fallthru
      _
    %v82 = vld [vmem:[#allocation2] sm:$0xff]
    %v83 = vld [vmem:[#allocation2 + $0x8] sm:$0xff]
    %v84 = vld [vmem:[#allocation2 + $0x10] sm:$0xff]
    %v85 = vpack.c.bf16 %v82, %v82
    %v86 = vpack.c.bf16 %v83, %v83
    %v87 = vpack.c.bf16 %v84, %v84
    %v88 = vld [vmem:[#allocation5] sm:$0xf]
    %v89 = vld [vmem:[#allocation5 + $0x4] sm:$0xf]
    %v90 = vld [vmem:[#allocation5 + $0x8] sm:$0xf]
    %v91 = vld [vmem:[#allocation5 + $0xc] sm:$0xf]
    %v92 = vld [vmem:[#allocation5 + $0x10] sm:$0xf]
    %v93 = vld [vmem:[#allocation5 + $0x14] sm:$0xf]
    %v94 = vld [vmem:[#allocation5 + $0x18] sm:$0xf]
    %v95 = vld [vmem:[#allocation5 + $0x1c] sm:$0xf]
    %v96 = vld [vmem:[#allocation5 + $0x20] sm:$0xf]
    %v97 = vld [vmem:[#allocation5 + $0x24] sm:$0xf]
    %v98 = vld [vmem:[#allocation5 + $0x28] sm:$0xf]
    %v99 = vld [vmem:[#allocation5 + $0x2c] sm:$0xf]
    %v100 = vld [vmem:[#allocation5 + $0x30] sm:$0xf]
    %v101 = vld [vmem:[#allocation5 + $0x34] sm:$0xf]
    %v102 = vld [vmem:[#allocation5 + $0x38] sm:$0xf]
    %v103 = vld [vmem:[#allocation5 + $0x3c] sm:$0xf]
    %v104 = vld [vmem:[#allocation5 + $0x40] sm:$0xf]
    %v105 = vld [vmem:[#allocation5 + $0x44] sm:$0xf]
    %v106 = vld [vmem:[#allocation5 + $0x48] sm:$0xf]
    %v107 = vld [vmem:[#allocation5 + $0x4c] sm:$0xf]
    %v108 = vld [vmem:[#allocation5 + $0x50] sm:$0xf]
    %v109 = vld [vmem:[#allocation5 + $0x54] sm:$0xf]
    %v110 = vld [vmem:[#allocation5 + $0x58] sm:$0xf]
    %v111 = vld [vmem:[#allocation5 + $0x5c] sm:$0xf]
    %v112 = vld [vmem:[#allocation5 + $0x60] sm:$0xf]
    %v113 = vld [vmem:[#allocation5 + $0x64] sm:$0xf]
    %v114 = vld [vmem:[#allocation5 + $0x68] sm:$0xf]
    %v115 = vld [vmem:[#allocation5 + $0x6c] sm:$0xf]
    %v116 = vld [vmem:[#allocation5 + $0x70] sm:$0xf]
    %v117 = vld [vmem:[#allocation5 + $0x74] sm:$0xf]
    %v118 = vld [vmem:[#allocation5 + $0x78] sm:$0xf]
    %v119 = vld [vmem:[#allocation5 + $0x7c] sm:$0xf]
    %v120 = vld [vmem:[#allocation5 + $0x80] sm:$0xf]
    %v121 = vld [vmem:[#allocation5 + $0x84] sm:$0xf]
    %v122 = vld [vmem:[#allocation5 + $0x88] sm:$0xf]
    %v123 = vld [vmem:[#allocation5 + $0x8c] sm:$0xf]
    %v124 = vld [vmem:[#allocation5 + $0x90] sm:$0xf]
    %v125 = vld [vmem:[#allocation5 + $0x94] sm:$0xf]
    %v126 = vld [vmem:[#allocation5 + $0x98] sm:$0xf]
    %v127 = vld [vmem:[#allocation5 + $0x9c] sm:$0xf]
    %v128 = vld [vmem:[#allocation5 + $0xa0] sm:$0xf]
    %v129 = vld [vmem:[#allocation5 + $0xa4] sm:$0xf]
    %v130 = vld [vmem:[#allocation5 + $0xa8] sm:$0xf]
    %v131 = vld [vmem:[#allocation5 + $0xac] sm:$0xf]
    %v132 = vld [vmem:[#allocation5 + $0xb0] sm:$0xf]
    %v133 = vld [vmem:[#allocation5 + $0xb4] sm:$0xf]
    %v134 = vld [vmem:[#allocation5 + $0xb8] sm:$0xf]
    %v135 = vld [vmem:[#allocation5 + $0xbc] sm:$0xf]
    %v136 = vld [vmem:[%s2] sm:$0x1]
    %v138 = vperm.slane %v136, 0
    %v188 = vunpack.c.l.b16 %v88
    %v189 = vunpack.c.l.b16 %v89
    %v190 = vunpack.c.l.b16 %v90
    %v191 = vunpack.c.l.b16 %v91
    %v192 = vunpack.c.l.b16 %v92
    %v193 = vunpack.c.l.b16 %v93
    %v194 = vunpack.c.l.b16 %v94
    %v195 = vunpack.c.l.b16 %v95
    %v196 = vunpack.c.l.b16 %v96
    %v197 = vunpack.c.l.b16 %v97
    %v198 = vunpack.c.l.b16 %v98
    %v199 = vunpack.c.l.b16 %v99
    %v200 = vunpack.c.l.b16 %v100
    %v201 = vunpack.c.l.b16 %v101
    %v202 = vunpack.c.l.b16 %v102
    %v203 = vunpack.c.l.b16 %v103
    %v204 = vunpack.c.l.b16 %v104
    %v205 = vunpack.c.l.b16 %v105
    %v206 = vunpack.c.l.b16 %v106
    %v207 = vunpack.c.l.b16 %v107
    %v208 = vunpack.c.l.b16 %v108
    %v209 = vunpack.c.l.b16 %v109
    %v210 = vunpack.c.l.b16 %v110
    %v211 = vunpack.c.l.b16 %v111
    %v212 = vunpack.c.l.b16 %v112
    %v213 = vunpack.c.l.b16 %v113
    %v214 = vunpack.c.l.b16 %v114
    %v215 = vunpack.c.l.b16 %v115
    %v216 = vunpack.c.l.b16 %v116
    %v217 = vunpack.c.l.b16 %v117
    %v218 = vunpack.c.l.b16 %v118
    %v219 = vunpack.c.l.b16 %v119
    %v220 = vunpack.c.l.b16 %v120
    %v221 = vunpack.c.l.b16 %v121
    %v222 = vunpack.c.l.b16 %v122
    %v223 = vunpack.c.l.b16 %v123
    %v224 = vunpack.c.l.b16 %v124
    %v225 = vunpack.c.l.b16 %v125
    %v226 = vunpack.c.l.b16 %v126
    %v227 = vunpack.c.l.b16 %v127
    %v228 = vunpack.c.l.b16 %v128
    %v229 = vunpack.c.l.b16 %v129
    %v230 = vunpack.c.l.b16 %v130
    %v231 = vunpack.c.l.b16 %v131
    %v232 = vunpack.c.l.b16 %v132
    %v233 = vunpack.c.l.b16 %v133
    %v234 = vunpack.c.l.b16 %v134
    %v235 = vunpack.c.l.b16 %v135
    %v236 = vpack.c.b16 %v189, %v188
    %v237 = vpack.c.b16 %v191, %v190
    %v238 = vpack.c.b16 %v193, %v192
    %v239 = vpack.c.b16 %v195, %v194
    %v240 = vpack.c.b16 %v197, %v196
    %v241 = vpack.c.b16 %v199, %v198
    %v242 = vpack.c.b16 %v201, %v200
    %v243 = vpack.c.b16 %v203, %v202
    %v244 = vpack.c.b16 %v205, %v204
    %v245 = vpack.c.b16 %v207, %v206
    %v246 = vpack.c.b16 %v209, %v208
    %v247 = vpack.c.b16 %v211, %v210
    %v248 = vpack.c.b16 %v213, %v212
    %v249 = vpack.c.b16 %v215, %v214
    %v250 = vpack.c.b16 %v217, %v216
    %v251 = vpack.c.b16 %v219, %v218
    %v252 = vpack.c.b16 %v221, %v220
    %v253 = vpack.c.b16 %v223, %v222
    %v254 = vpack.c.b16 %v225, %v224
    %v255 = vpack.c.b16 %v227, %v226
    %v256 = vpack.c.b16 %v229, %v228
    %v257 = vpack.c.b16 %v231, %v230
    %v258 = vpack.c.b16 %v233, %v232
    %v259 = vpack.c.b16 %v235, %v234
    %284 = vmatpush.bf16.msra.mxu0 %v243
    %285 = vmatpush.bf16.msra.mxu0 %v242
    %286 = vmatpush.bf16.msra.mxu0 %v241
    %287 = vmatpush.bf16.msra.mxu0 %v240
    %288 = vmatpush.bf16.msra.mxu0 %v239
    %289 = vmatpush.bf16.msra.mxu0 %v238
    %290 = vmatpush.bf16.msra.mxu0 %v237
    %291 = vmatpush.bf16.msra.mxu0 %v236
    %292 = vmatmul.bf16.gmra.mxu0 %v85
    %v293 = vpop.f32.mrf.mxu0
    %v294 = vadd.f32 %v138, %v293
    %v295 = vpop.f32.mrf.mxu0
    %296 = vdwg.mxu0
    %297 = vmatpush.bf16.msra.mxu0 %v251
    %298 = vmatpush.bf16.msra.mxu0 %v250
    %299 = vmatpush.bf16.msra.mxu0 %v249
    %300 = vmatpush.bf16.msra.mxu0 %v248
    %301 = vmatpush.bf16.msra.mxu0 %v247
    %302 = vmatpush.bf16.msra.mxu0 %v246
    %303 = vmatpush.bf16.msra.mxu0 %v245
    %304 = vmatpush.bf16.msra.mxu0 %v244
    %305 = vmatmul.bf16.gmra.mxu0 %v86
    %v306 = vpop.f32.mrf.mxu0
    %v307 = vadd.f32 %v294, %v306
    %v308 = vpop.f32.mrf.mxu0
    %309 = vdwg.mxu0
    %310 = vmatpush.bf16.msra.mxu0 %v259
    %311 = vmatpush.bf16.msra.mxu0 %v258
    %312 = vmatpush.bf16.msra.mxu0 %v257
    %313 = vmatpush.bf16.msra.mxu0 %v256
    %314 = vmatpush.bf16.msra.mxu0 %v255
    %315 = vmatpush.bf16.msra.mxu0 %v254
    %316 = vmatpush.bf16.msra.mxu0 %v253
    %317 = vmatpush.bf16.msra.mxu0 %v252
    %318 = vmatmul.bf16.gmra.mxu0 %v87
    %v319 = vpop.f32.mrf.mxu0
    %v320 = vadd.f32 %v307, %v319
    %v321 = vpop.f32.mrf.mxu0
    %322 = vdwg.mxu0
    %v323 = vmax.f32 %v320, 0.0
    %v324 = vpack.c.bf16 %v323, %v323
    %v325 = vld [vmem:[#allocation7] sm:$0xf]
    %v326 = vld [vmem:[#allocation7 + $0x4] sm:$0xf]
    %v327 = vld [vmem:[#allocation7 + $0x8] sm:$0xf]
    %v328 = vld [vmem:[#allocation7 + $0xc] sm:$0xf]
    %v329 = vld [vmem:[#allocation7 + $0x10] sm:$0xf]
    %v330 = vld [vmem:[#allocation7 + $0x14] sm:$0xf]
    %v331 = vld [vmem:[#allocation7 + $0x18] sm:$0xf]
    %v332 = vld [vmem:[#allocation7 + $0x1c] sm:$0xf]
    %v333 = vld [vmem:[#allocation7 + $0x20] sm:$0xf]
    %v334 = vld [vmem:[#allocation7 + $0x24] sm:$0xf]
    %v335 = vld [vmem:[#allocation7 + $0x28] sm:$0xf]
    %v336 = vld [vmem:[#allocation7 + $0x2c] sm:$0xf]
    %v337 = vld [vmem:[#allocation7 + $0x30] sm:$0xf]
    %v338 = vld [vmem:[#allocation7 + $0x34] sm:$0xf]
    %v339 = vld [vmem:[#allocation7 + $0x38] sm:$0xf]
    %v340 = vld [vmem:[#allocation7 + $0x3c] sm:$0xf]
    %v341 = vld [vmem:[#allocation8] sm:$0x1]
    %v343 = vperm.slane %v341, 0
    %v361 = vunpack.c.l.b16 %v325
    %v362 = vunpack.c.l.b16 %v326
    %v363 = vunpack.c.l.b16 %v327
    %v364 = vunpack.c.l.b16 %v328
    %v365 = vunpack.c.l.b16 %v329
    %v366 = vunpack.c.l.b16 %v330
    %v367 = vunpack.c.l.b16 %v331
    %v368 = vunpack.c.l.b16 %v332
    %v369 = vunpack.c.l.b16 %v333
    %v370 = vunpack.c.l.b16 %v334
    %v371 = vunpack.c.l.b16 %v335
    %v372 = vunpack.c.l.b16 %v336
    %v373 = vunpack.c.l.b16 %v337
    %v374 = vunpack.c.l.b16 %v338
    %v375 = vunpack.c.l.b16 %v339
    %v376 = vunpack.c.l.b16 %v340
    %v377 = vpack.c.b16 %v362, %v361
    %v378 = vpack.c.b16 %v364, %v363
    %v379 = vpack.c.b16 %v366, %v365
    %v380 = vpack.c.b16 %v368, %v367
    %v381 = vpack.c.b16 %v370, %v369
    %v382 = vpack.c.b16 %v372, %v371
    %v383 = vpack.c.b16 %v374, %v373
    %v384 = vpack.c.b16 %v376, %v375
    %393 = vmatpush.bf16.msra.mxu0 %v384
    %394 = vmatpush.bf16.msra.mxu0 %v383
    %395 = vmatpush.bf16.msra.mxu0 %v382
    %396 = vmatpush.bf16.msra.mxu0 %v381
    %397 = vmatpush.bf16.msra.mxu0 %v380
    %398 = vmatpush.bf16.msra.mxu0 %v379
    %399 = vmatpush.bf16.msra.mxu0 %v378
    %400 = vmatpush.bf16.msra.mxu0 %v377
    %401 = vmatmul.bf16.gmra.mxu0 %v324
    %v402 = vpop.f32.mrf.mxu0
    %v403 = vadd.f32 %v343, %v402
    %v404 = vpop.f32.mrf.mxu0
    %405 = vdwg.mxu0
    %v406 = vmax.f32 %v403, 0.0
    %v407 = vpack.c.bf16 %v406, %v406
    %s408 = scalar_lea.vmem [#allocation7], 64
    %v409 = vld [vmem:[%s408] sm:$0xf]
    %v410 = vld [vmem:[%s408 + $0x4] sm:$0xf]
    %v411 = vld [vmem:[%s408 + $0x8] sm:$0xf]
    %v412 = vld [vmem:[%s408 + $0xc] sm:$0xf]
    %v413 = vld [vmem:[%s408 + $0x10] sm:$0xf]
    %v414 = vld [vmem:[%s408 + $0x14] sm:$0xf]
    %v415 = vld [vmem:[%s408 + $0x18] sm:$0xf]
    %v416 = vld [vmem:[%s408 + $0x1c] sm:$0xf]
    %v417 = vld [vmem:[%s408 + $0x20] sm:$0xf]
    %v418 = vld [vmem:[%s408 + $0x24] sm:$0xf]
    %v419 = vld [vmem:[%s408 + $0x28] sm:$0xf]
    %v420 = vld [vmem:[%s408 + $0x2c] sm:$0xf]
    %v421 = vld [vmem:[%s408 + $0x30] sm:$0xf]
    %v422 = vld [vmem:[%s408 + $0x34] sm:$0xf]
    %v423 = vld [vmem:[%s408 + $0x38] sm:$0xf]
    %v424 = vld [vmem:[%s408 + $0x3c] sm:$0xf]
    %s425 = scalar_lea.vmem [#allocation8], 1
    %v426 = vld [vmem:[%s425] sm:$0x1]
    %v428 = vperm.slane %v426, 0
    %v446 = vunpack.c.l.b16 %v409
    %v447 = vunpack.c.l.b16 %v410
    %v448 = vunpack.c.l.b16 %v411
    %v449 = vunpack.c.l.b16 %v412
    %v450 = vunpack.c.l.b16 %v413
    %v451 = vunpack.c.l.b16 %v414
    %v452 = vunpack.c.l.b16 %v415
    %v453 = vunpack.c.l.b16 %v416
    %v454 = vunpack.c.l.b16 %v417
    %v455 = vunpack.c.l.b16 %v418
    %v456 = vunpack.c.l.b16 %v419
    %v457 = vunpack.c.l.b16 %v420
    %v458 = vunpack.c.l.b16 %v421
    %v459 = vunpack.c.l.b16 %v422
    %v460 = vunpack.c.l.b16 %v423
    %v461 = vunpack.c.l.b16 %v424
    %v462 = vpack.c.b16 %v447, %v446
    %v463 = vpack.c.b16 %v449, %v448
    %v464 = vpack.c.b16 %v451, %v450
    %v465 = vpack.c.b16 %v453, %v452
    %v466 = vpack.c.b16 %v455, %v454
    %v467 = vpack.c.b16 %v457, %v456
    %v468 = vpack.c.b16 %v459, %v458
    %v469 = vpack.c.b16 %v461, %v460
    %478 = vmatpush.bf16.msra.mxu0 %v469
    %479 = vmatpush.bf16.msra.mxu0 %v468
    %480 = vmatpush.bf16.msra.mxu0 %v467
    %481 = vmatpush.bf16.msra.mxu0 %v466
    %482 = vmatpush.bf16.msra.mxu0 %v465
    %483 = vmatpush.bf16.msra.mxu0 %v464
    %484 = vmatpush.bf16.msra.mxu0 %v463
    %485 = vmatpush.bf16.msra.mxu0 %v462
    %486 = vmatmul.bf16.gmra.mxu0 %v407
    %v487 = vpop.f32.mrf.mxu0
    %v488 = vadd.f32 %v428, %v487
    %v489 = vpop.f32.mrf.mxu0
    %490 = vdwg.mxu0
    %v491 = vmax.f32 %v488, 0.0
    %v492 = vpack.c.bf16 %v491, %v491
    %s493 = scalar_lea.vmem [#allocation7], 128
    %v494 = vld [vmem:[%s493] sm:$0xf]
    %v495 = vld [vmem:[%s493 + $0x4] sm:$0xf]
    %v496 = vld [vmem:[%s493 + $0x8] sm:$0xf]
    %v497 = vld [vmem:[%s493 + $0xc] sm:$0xf]
    %v498 = vld [vmem:[%s493 + $0x10] sm:$0xf]
    %v499 = vld [vmem:[%s493 + $0x14] sm:$0xf]
    %v500 = vld [vmem:[%s493 + $0x18] sm:$0xf]
    %v501 = vld [vmem:[%s493 + $0x1c] sm:$0xf]
    %v502 = vld [vmem:[%s493 + $0x20] sm:$0xf]
    %v503 = vld [vmem:[%s493 + $0x24] sm:$0xf]
    %v504 = vld [vmem:[%s493 + $0x28] sm:$0xf]
    %v505 = vld [vmem:[%s493 + $0x2c] sm:$0xf]
    %v506 = vld [vmem:[%s493 + $0x30] sm:$0xf]
    %v507 = vld [vmem:[%s493 + $0x34] sm:$0xf]
    %v508 = vld [vmem:[%s493 + $0x38] sm:$0xf]
    %v509 = vld [vmem:[%s493 + $0x3c] sm:$0xf]
    %s510 = scalar_lea.vmem [#allocation8], 2
    %v511 = vld [vmem:[%s510] sm:$0x1]
    %v513 = vperm.slane %v511, 0
    %v531 = vunpack.c.l.b16 %v494
    %v532 = vunpack.c.l.b16 %v495
    %v533 = vunpack.c.l.b16 %v496
    %v534 = vunpack.c.l.b16 %v497
    %v535 = vunpack.c.l.b16 %v498
    %v536 = vunpack.c.l.b16 %v499
    %v537 = vunpack.c.l.b16 %v500
    %v538 = vunpack.c.l.b16 %v501
    %v539 = vunpack.c.l.b16 %v502
    %v540 = vunpack.c.l.b16 %v503
    %v541 = vunpack.c.l.b16 %v504
    %v542 = vunpack.c.l.b16 %v505
    %v543 = vunpack.c.l.b16 %v506
    %v544 = vunpack.c.l.b16 %v507
    %v545 = vunpack.c.l.b16 %v508
    %v546 = vunpack.c.l.b16 %v509
    %v547 = vpack.c.b16 %v532, %v531
    %v548 = vpack.c.b16 %v534, %v533
    %v549 = vpack.c.b16 %v536, %v535
    %v550 = vpack.c.b16 %v538, %v537
    %v551 = vpack.c.b16 %v540, %v539
    %v552 = vpack.c.b16 %v542, %v541
    %v553 = vpack.c.b16 %v544, %v543
    %v554 = vpack.c.b16 %v546, %v545
    %563 = vmatpush.bf16.msra.mxu0 %v554
    %564 = vmatpush.bf16.msra.mxu0 %v553
    %565 = vmatpush.bf16.msra.mxu0 %v552
    %566 = vmatpush.bf16.msra.mxu0 %v551
    %567 = vmatpush.bf16.msra.mxu0 %v550
    %568 = vmatpush.bf16.msra.mxu0 %v549
    %569 = vmatpush.bf16.msra.mxu0 %v548
    %570 = vmatpush.bf16.msra.mxu0 %v547
    %571 = vmatmul.bf16.gmra.mxu0 %v492
    %v572 = vpop.f32.mrf.mxu0
    %v573 = vadd.f32 %v513, %v572
    %v574 = vpop.f32.mrf.mxu0
    %575 = vdwg.mxu0
    %v576 = vmax.f32 %v573, 0.0
    %v577 = vpack.c.bf16 %v576, %v576
    %s578 = scalar_lea.vmem [#allocation7], 192
    %v579 = vld [vmem:[%s578] sm:$0xf]
    %v580 = vld [vmem:[%s578 + $0x4] sm:$0xf]
    %v581 = vld [vmem:[%s578 + $0x8] sm:$0xf]
    %v582 = vld [vmem:[%s578 + $0xc] sm:$0xf]
    %v583 = vld [vmem:[%s578 + $0x10] sm:$0xf]
    %v584 = vld [vmem:[%s578 + $0x14] sm:$0xf]
    %v585 = vld [vmem:[%s578 + $0x18] sm:$0xf]
    %v586 = vld [vmem:[%s578 + $0x1c] sm:$0xf]
    %v587 = vld [vmem:[%s578 + $0x20] sm:$0xf]
    %v588 = vld [vmem:[%s578 + $0x24] sm:$0xf]
    %v589 = vld [vmem:[%s578 + $0x28] sm:$0xf]
    %v590 = vld [vmem:[%s578 + $0x2c] sm:$0xf]
    %v591 = vld [vmem:[%s578 + $0x30] sm:$0xf]
    %v592 = vld [vmem:[%s578 + $0x34] sm:$0xf]
    %v593 = vld [vmem:[%s578 + $0x38] sm:$0xf]
    %v594 = vld [vmem:[%s578 + $0x3c] sm:$0xf]
    %s595 = scalar_lea.vmem [#allocation8], 3
    %v596 = vld [vmem:[%s595] sm:$0x1]
    %v598 = vperm.slane %v596, 0
    %v616 = vunpack.c.l.b16 %v579
    %v617 = vunpack.c.l.b16 %v580
    %v618 = vunpack.c.l.b16 %v581
    %v619 = vunpack.c.l.b16 %v582
    %v620 = vunpack.c.l.b16 %v583
    %v621 = vunpack.c.l.b16 %v584
    %v622 = vunpack.c.l.b16 %v585
    %v623 = vunpack.c.l.b16 %v586
    %v624 = vunpack.c.l.b16 %v587
    %v625 = vunpack.c.l.b16 %v588
    %v626 = vunpack.c.l.b16 %v589
    %v627 = vunpack.c.l.b16 %v590
    %v628 = vunpack.c.l.b16 %v591
    %v629 = vunpack.c.l.b16 %v592
    %v630 = vunpack.c.l.b16 %v593
    %v631 = vunpack.c.l.b16 %v594
    %v632 = vpack.c.b16 %v617, %v616
    %v633 = vpack.c.b16 %v619, %v618
    %v634 = vpack.c.b16 %v621, %v620
    %v635 = vpack.c.b16 %v623, %v622
    %v636 = vpack.c.b16 %v625, %v624
    %v637 = vpack.c.b16 %v627, %v626
    %v638 = vpack.c.b16 %v629, %v628
    %v639 = vpack.c.b16 %v631, %v630
    %648 = vmatpush.bf16.msra.mxu0 %v639
    %649 = vmatpush.bf16.msra.mxu0 %v638
    %650 = vmatpush.bf16.msra.mxu0 %v637
    %651 = vmatpush.bf16.msra.mxu0 %v636
    %652 = vmatpush.bf16.msra.mxu0 %v635
    %653 = vmatpush.bf16.msra.mxu0 %v634
    %654 = vmatpush.bf16.msra.mxu0 %v633
    %655 = vmatpush.bf16.msra.mxu0 %v632
    %656 = vmatmul.bf16.gmra.mxu0 %v577
    %v657 = vpop.f32.mrf.mxu0
    %v658 = vadd.f32 %v598, %v657
    %v659 = vpop.f32.mrf.mxu0
    %660 = vdwg.mxu0
    %v661 = vmax.f32 %v658, 0.0
    %v662 = vpack.c.bf16 %v661, %v661
    %s663 = scalar_lea.vmem [#allocation7], 256
    %v664 = vld [vmem:[%s663] sm:$0xf]
    %v665 = vld [vmem:[%s663 + $0x4] sm:$0xf]
    %v666 = vld [vmem:[%s663 + $0x8] sm:$0xf]
    %v667 = vld [vmem:[%s663 + $0xc] sm:$0xf]
    %v668 = vld [vmem:[%s663 + $0x10] sm:$0xf]
    %v669 = vld [vmem:[%s663 + $0x14] sm:$0xf]
    %v670 = vld [vmem:[%s663 + $0x18] sm:$0xf]
    %v671 = vld [vmem:[%s663 + $0x1c] sm:$0xf]
    %v672 = vld [vmem:[%s663 + $0x20] sm:$0xf]
    %v673 = vld [vmem:[%s663 + $0x24] sm:$0xf]
    %v674 = vld [vmem:[%s663 + $0x28] sm:$0xf]
    %v675 = vld [vmem:[%s663 + $0x2c] sm:$0xf]
    %v676 = vld [vmem:[%s663 + $0x30] sm:$0xf]
    %v677 = vld [vmem:[%s663 + $0x34] sm:$0xf]
    %v678 = vld [vmem:[%s663 + $0x38] sm:$0xf]
    %v679 = vld [vmem:[%s663 + $0x3c] sm:$0xf]
    %s680 = scalar_lea.vmem [#allocation8], 4
    %v681 = vld [vmem:[%s680] sm:$0x1]
    %v683 = vperm.slane %v681, 0
    %v701 = vunpack.c.l.b16 %v664
    %v702 = vunpack.c.l.b16 %v665
    %v703 = vunpack.c.l.b16 %v666
    %v704 = vunpack.c.l.b16 %v667
    %v705 = vunpack.c.l.b16 %v668
    %v706 = vunpack.c.l.b16 %v669
    %v707 = vunpack.c.l.b16 %v670
    %v708 = vunpack.c.l.b16 %v671
    %v709 = vunpack.c.l.b16 %v672
    %v710 = vunpack.c.l.b16 %v673
    %v711 = vunpack.c.l.b16 %v674
    %v712 = vunpack.c.l.b16 %v675
    %v713 = vunpack.c.l.b16 %v676
    %v714 = vunpack.c.l.b16 %v677
    %v715 = vunpack.c.l.b16 %v678
    %v716 = vunpack.c.l.b16 %v679
    %v717 = vpack.c.b16 %v702, %v701
    %v718 = vpack.c.b16 %v704, %v703
    %v719 = vpack.c.b16 %v706, %v705
    %v720 = vpack.c.b16 %v708, %v707
    %v721 = vpack.c.b16 %v710, %v709
    %v722 = vpack.c.b16 %v712, %v711
    %v723 = vpack.c.b16 %v714, %v713
    %v724 = vpack.c.b16 %v716, %v715
    %733 = vmatpush.bf16.msra.mxu0 %v724
    %734 = vmatpush.bf16.msra.mxu0 %v723
    %735 = vmatpush.bf16.msra.mxu0 %v722
    %736 = vmatpush.bf16.msra.mxu0 %v721
    %737 = vmatpush.bf16.msra.mxu0 %v720
    %738 = vmatpush.bf16.msra.mxu0 %v719
    %739 = vmatpush.bf16.msra.mxu0 %v718
    %740 = vmatpush.bf16.msra.mxu0 %v717
    %741 = vmatmul.bf16.gmra.mxu0 %v662
    %v742 = vpop.f32.mrf.mxu0
    %v743 = vadd.f32 %v683, %v742
    %v744 = vpop.f32.mrf.mxu0
    %745 = vdwg.mxu0
    %746 = vst [vmem:[#allocation10] sm:$0xff] %v743
    // Predicated region
    $region38: #{tpu_custom_call.1} parent=1 // pred_check
      _
    $region39: #{tpu_custom_call.1} parent=1 // pred_check_branch
      %748 = sbr.rel (0) target = $region41
    $region40: #{tpu_custom_call.1} parent=1 // pred_region
      %750 = vsyncadd [#allocation4], 0
      %s752 = sshll.u32 [#allocation10], 4
      %s753 = int_to_ptr.vmem [resolvable:$true] %s752
      %s754 = sshll.u32 %s5, 4
      %s755 = int_to_ptr.hbm [resolvable:$true] %s754
      %757 = dma.vmem_to_hbm [thread:$0]  %s753, 128, %s755, [#allocation4]
    $region41: #{tpu_custom_call.1} parent=1 // pred_fallthru
      _
    // Predicated region
    $region42: #{tpu_custom_call.1} parent=1 // pred_check
      _
    $region43: #{tpu_custom_call.1} parent=1 // pred_check_branch
      %759 = sbr.rel (0) target = $region45
    $region44: #{tpu_custom_call.1} parent=1 // pred_region
      %761 = dma.done [#allocation4], 128
    $region45: #{tpu_custom_call.1} parent=1 // pred_fallthru
      _
    %762 = vsyncpa [#allocation3], 1
    %763 = vsyncpa [#allocation6], 1
    %764 = vsyncpa [#allocation9], 1
    %765 = vsyncpa [#allocation4], 1

</llo_original>
